<compile_context>
chip_gen: v6e
topology: v6e:2x2x1
jax: 0.10.0
libtpu: 0.0.40
codegen_flags: <defaults>
</compile_context>

<pallas_src>
import functools

import jax
import jax.numpy as jnp
from jax import lax
from jax.experimental import pallas as pl
from jax.experimental.pallas import tpu as pltpu

_MIB = 1024 * 1024
_CHUNK_LANES = 512          # f32 working set per chunk ~= C * 512 * 4 B
_MAX_UNROLLED_CHUNKS = 64   # cap on the statically unrolled in-kernel HW loop


def _vmem_capacity_bytes() -> int:
    """Physical VMEM per TensorCore: get_tpu_info -> device_kind -> 64 MiB."""
    try:
        return int(pltpu.get_tpu_info().vmem_capacity_bytes)
    except Exception:
        pass
    try:
        kind = jax.devices()[0].device_kind.lower()
    except Exception:
        kind = ""
    if "v7" in kind:
        return 64 * _MIB
    if any(tag in kind for tag in ("v6", "trillium", "v5", "v4")):
        return 128 * _MIB
    return 64 * _MIB  # conservative default


def _hw_chunking(hw: int):
    """Lane-dense chunk size for the in-kernel streamed reduce/apply."""
    ck = _CHUNK_LANES
    while -(-hw // ck) > _MAX_UNROLLED_CHUNKS:
        ck *= 2
    nfull = hw // ck
    rem = hw - nfull * ck
    return ck, nfull, rem


# ---------------------------------------------------------------------------
# Shared in-kernel helpers (operate on a (C, HW) slab ref, f32 math).
# ---------------------------------------------------------------------------
def _sumsq_f32(x_ref):
    """Per-channel sum of squares over the lane (HW) axis, f32 accumulation.

    Streams the slab in lane-dense chunks so the f32 upcast temp stays small even
    for bf16 inputs (no full-slab f32 copy is ever materialized).
    """
    C, HW = x_ref.shape
    ck, nfull, rem = _hw_chunking(HW)
    ss = jnp.zeros((C, 1), jnp.float32)
    for i in range(nfull):                                   # static, unrolled
        xc = x_ref[:, i * ck:(i + 1) * ck].astype(jnp.float32)
        ss = ss + jnp.sum(xc * xc, axis=-1, keepdims=True)
    if rem:
        xt = x_ref[:, nfull * ck:HW].astype(jnp.float32)
        ss = ss + jnp.sum(xt * xt, axis=-1, keepdims=True)
    return ss


def _scale_from_sumsq(ss, gamma):
    gx = jnp.sqrt(ss)                                        # (C, 1)
    nx = gx / (jnp.mean(gx, axis=0, keepdims=True) + 1e-6)   # channel mean (sublanes)
    return gamma * nx + 1.0                                  # (C, 1)


def _apply_scale_bias(x_ref, o_ref, scale, beta):
    """o = scale * x + beta, streamed in lane-dense chunks (x_ref may alias o_ref)."""
    _, HW = x_ref.shape
    ck, nfull, rem = _hw_chunking(HW)

    def _one(lo, hi):
        xc = x_ref[:, lo:hi].astype(jnp.float32)
        o_ref[:, lo:hi] = (xc * scale + beta).astype(o_ref.dtype)

    for i in range(nfull):                                   # static, unrolled
        _one(i * ck, (i + 1) * ck)
    if rem:
        _one(nfull * ck, HW)


# ---------------------------------------------------------------------------
# Path "single": whole (C, HW) slab per image as an auto-pipelined BlockSpec block.
# ---------------------------------------------------------------------------
def _grn_slab_kernel(x_ref, gamma_ref, beta_ref, o_ref):
    ss = _sumsq_f32(x_ref)                                   # (C, 1) f32
    scale = _scale_from_sumsq(ss, gamma_ref[...])
    _apply_scale_bias(x_ref, o_ref, scale, beta_ref[...])


def _grn_single_pass(x, gamma, beta, vmem_limit):
    N, C, HW = x.shape
    itemsize = jnp.dtype(x.dtype).itemsize
    return pl.pallas_call(
        _grn_slab_kernel,
        out_shape=jax.ShapeDtypeStruct((N, C, HW), x.dtype),
        grid_spec=pltpu.PrefetchScalarGridSpec(
            num_scalar_prefetch=0,
            grid=(N,),
            in_specs=[
                pl.BlockSpec((pl.Squeezed(), C, HW), lambda n: (n, 0, 0)),
                pl.BlockSpec((C, 1), lambda n: (0, 0)),
                pl.BlockSpec((C, 1), lambda n: (0, 0)),
            ],
            out_specs=pl.BlockSpec((pl.Squeezed(), C, HW), lambda n: (n, 0, 0)),
        ),
        compiler_params=pltpu.CompilerParams(
            dimension_semantics=("parallel",),
            vmem_limit_bytes=vmem_limit,
        ),
        cost_estimate=pl.CostEstimate(
            flops=4 * N * C * HW,
            transcendentals=N * C,
            bytes_accessed=2 * N * C * HW * itemsize,
        ),
    )(x, gamma, beta)


# ---------------------------------------------------------------------------
# Path "manual": 1x-slab VMEM footprint via pl.ANY + explicit slab DMA (v7x-sized
# feature maps that would not fit the 4x-slab auto-pipelined path).
# ---------------------------------------------------------------------------
def _grn_manual_slab_kernel(x_hbm, gamma_ref, beta_ref, o_hbm, slab_ref):
    n = pl.program_id(0)
    pltpu.sync_copy(x_hbm.at[n], slab_ref)                   # HBM -> VMEM (full slab)
    ss = _sumsq_f32(slab_ref)
    scale = _scale_from_sumsq(ss, gamma_ref[...])
    _apply_scale_bias(slab_ref, slab_ref, scale, beta_ref[...])  # in place
    pltpu.sync_copy(slab_ref, o_hbm.at[n])                   # VMEM -> HBM
    # TODO(synk): stream chunk-level async copies to overlap reduce/apply with DMA.


def _grn_single_pass_manual(x, gamma, beta, vmem_limit):
    N, C, HW = x.shape
    itemsize = jnp.dtype(x.dtype).itemsize
    return pl.pallas_call(
        _grn_manual_slab_kernel,
        out_shape=jax.ShapeDtypeStruct((N, C, HW), x.dtype),
        grid_spec=pltpu.PrefetchScalarGridSpec(
            num_scalar_prefetch=0,
            grid=(N,),
            in_specs=[
                pl.BlockSpec(memory_space=pl.ANY),
                pl.BlockSpec((C, 1), lambda n: (0, 0)),
                pl.BlockSpec((C, 1), lambda n: (0, 0)),
            ],
            out_specs=pl.BlockSpec(memory_space=pl.ANY),
            scratch_shapes=[pltpu.VMEM((C, HW), x.dtype)],
        ),
        compiler_params=pltpu.CompilerParams(
            dimension_semantics=("arbitrary",),
            vmem_limit_bytes=vmem_limit,
        ),
        cost_estimate=pl.CostEstimate(
            flops=4 * N * C * HW,
            transcendentals=N * C,
            bytes_accessed=2 * N * C * HW * itemsize,
        ),
    )(x, gamma, beta)


# ---------------------------------------------------------------------------
# Path "two_pass": HW-tiled fallback for slabs larger than VMEM.
# ---------------------------------------------------------------------------
def _grn_sumsq_kernel(x_ref, ss_ref, acc_ref, *, hw, t_hw, need_mask):
    k = pl.program_id(1)

    @pl.when(k == 0)
    def _():
        acc_ref[...] = jnp.zeros_like(acc_ref)

    x = x_ref[...].astype(jnp.float32)                       # (C, t_hw)
    if need_mask:
        col = lax.broadcasted_iota(jnp.int32, x.shape, 1)
        x = jnp.where(k * t_hw + col < hw, x, 0.0)           # zero the ragged tail
    acc_ref[...] += jnp.sum(x * x, axis=-1, keepdims=True)   # f32 VMEM accumulator

    @pl.when(k == pl.num_programs(1) - 1)
    def _():
        ss_ref[...] = acc_ref[...]                           # single narrow store


def _grn_apply_kernel(x_ref, scale_ref, beta_ref, o_ref):
    o_ref[...] = (
        x_ref[...].astype(jnp.float32) * scale_ref[...] + beta_ref[...]
    ).astype(o_ref.dtype)


def _grn_two_pass(x, gamma, beta, vmem_cap, t_hw=None):
    N, C, HW = x.shape
    itemsize = jnp.dtype(x.dtype).itemsize

    big_vmem = vmem_cap >= 100 * _MIB
    vmem_limit = int(min((64 if big_vmem else 32) * _MIB, 0.8 * vmem_cap))
    if t_hw is None:
        target_tile_bytes = (8 if big_vmem else 4) * _MIB    # lane-dense tiles
        t_hw = max(128, (target_tile_bytes // max(C * itemsize, 1)) // 128 * 128)
    if t_hw >= HW:
        t_hw = HW                                            # full dim is always legal
    K = pl.cdiv(HW, t_hw)
    need_mask = (HW % t_hw) != 0

    # Pass 1: per-(n, c) sum of squares over HW (reduction axis last, scratch acc).
    ss = pl.pallas_call(
        functools.partial(_grn_sumsq_kernel, hw=HW, t_hw=t_hw, need_mask=need_mask),
        out_shape=jax.ShapeDtypeStruct((N, C, 1), jnp.float32),
        grid_spec=pltpu.PrefetchScalarGridSpec(
            num_scalar_prefetch=0,
            grid=(N, K),
            in_specs=[pl.BlockSpec((pl.Squeezed(), C, t_hw), lambda n, k: (n, 0, k))],
            out_specs=pl.BlockSpec((pl.Squeezed(), C, 1), lambda n, k: (n, 0, 0)),
            scratch_shapes=[pltpu.VMEM((C, 1), jnp.float32)],
        ),
        compiler_params=pltpu.CompilerParams(
            dimension_semantics=("parallel", "arbitrary"),
            vmem_limit_bytes=vmem_limit,
        ),
        cost_estimate=pl.CostEstimate(
            flops=2 * N * C * HW,
            transcendentals=0,
            bytes_accessed=N * C * HW * itemsize + N * C * 4,
        ),
    )(x)

    # Tiny (N, C) math in plain XLA: Gx, Nx, fused per-(n,c) scale.
    gx = jnp.sqrt(ss)                                        # (N, C, 1)
    nx = gx / (jnp.mean(gx, axis=1, keepdims=True) + 1e-6)   # (N, C, 1)
    scale = (gamma[None] * nx + 1.0).astype(jnp.float32)     # (N, C, 1)

    # Pass 2: elementwise apply, both grid axes parallel (megacore-friendly).
    out = pl.pallas_call(
        _grn_apply_kernel,
        out_shape=jax.ShapeDtypeStruct((N, C, HW), x.dtype),
        grid_spec=pltpu.PrefetchScalarGridSpec(
            num_scalar_prefetch=0,
            grid=(N, K),
            in_specs=[
                pl.BlockSpec((pl.Squeezed(), C, t_hw), lambda n, k: (n, 0, k)),
                pl.BlockSpec((pl.Squeezed(), C, 1), lambda n, k: (n, 0, 0)),
                pl.BlockSpec((C, 1), lambda n, k: (0, 0)),
            ],
            out_specs=pl.BlockSpec((pl.Squeezed(), C, t_hw), lambda n, k: (n, 0, k)),
        ),
        compiler_params=pltpu.CompilerParams(
            dimension_semantics=("parallel", "parallel"),
            vmem_limit_bytes=vmem_limit,
        ),
        cost_estimate=pl.CostEstimate(
            flops=2 * N * C * HW,
            transcendentals=0,
            bytes_accessed=2 * N * C * HW * itemsize + N * C * 4,
        ),
    )(x, scale, beta)
    return out


# ---------------------------------------------------------------------------
# Public wrapper.
# ---------------------------------------------------------------------------
def grn_pallas(x_nchw, gamma, beta=None, *, force_path=None, t_hw=None):
    """GRN forward. x_nchw: (N, C, H, W); gamma/beta: (C,) or (1, C, 1, 1).

    beta=None corresponds to the use_bias=False variant of the module.
    force_path: None | "single" | "manual" | "two_pass" (testing / tuning hook).
    """
    N, C, H, W = x_nchw.shape
    HW = H * W
    x = x_nchw.reshape(N, C, HW)                             # zero-copy view of NCHW
    g = jnp.asarray(gamma).reshape(C, 1).astype(jnp.float32)
    if beta is None:
        b = jnp.zeros((C, 1), jnp.float32)
    else:
        b = jnp.asarray(beta).reshape(C, 1).astype(jnp.float32)

    vmem_cap = _vmem_capacity_bytes()
    itemsize = jnp.dtype(x.dtype).itemsize
    ck, _, _ = _hw_chunking(HW)
    temps = 4 * C * min(ck, HW) * 4 + 4 * _MIB               # f32 chunk temps + slack
    slab = C * HW * itemsize
    budget = int(0.8 * vmem_cap)

    live_auto = 4 * slab + temps                             # double-buffered in + out
    live_manual = slab + temps                               # single resident slab

    if force_path is None:
        if live_auto <= budget:
            path = "single"
        elif live_manual <= budget:
            path = "manual"
        else:
            path = "two_pass"
    else:
        path = force_path

    if path == "single":
        vmem_limit = int(min(max(live_auto + 8 * _MIB, 32 * _MIB), vmem_cap))
        out = _grn_single_pass(x, g, b, vmem_limit)
    elif path == "manual":
        vmem_limit = int(min(max(live_manual + 8 * _MIB, 32 * _MIB), vmem_cap))
        out = _grn_single_pass_manual(x, g, b, vmem_limit)
    else:
        out = _grn_two_pass(x, g, b, vmem_cap, t_hw=t_hw)
    return out.reshape(N, C, H, W)


def grn_reference(x, gamma, beta=None):
    """Pure-JAX reference mirroring the PyTorch forward (NCHW)."""
    xf = x.astype(jnp.float32)
    gx = jnp.sqrt(jnp.sum(xf * xf, axis=(-1, -2), keepdims=True))    # (N, C, 1, 1)
    nx = gx / (jnp.mean(gx, axis=1, keepdims=True) + 1e-6)           # (N, C, 1, 1)
    g = jnp.asarray(gamma).reshape(1, -1, 1, 1).astype(jnp.float32)
    out = (g * nx + 1.0) * xf
    if beta is not None:
        out = out + jnp.asarray(beta).reshape(1, -1, 1, 1).astype(jnp.float32)
    return out.astype(x.dtype)


if __name__ == "__main__":
    key = jax.random.PRNGKey(0)
    kx, kg, kb = jax.random.split(key, 3)

    def run_case(name, shape, dtype, *, force_path=None, t_hw=None, use_bias=True,
                 atol=1e-5, rtol=1e-5):
        N, C, H, W = shape
        x = jax.random.normal(kx, shape, dtype=jnp.float32).astype(dtype)
        g = 0.1 * jax.random.normal(kg, (C,), dtype=jnp.float32)
        b = 0.1 * jax.random.normal(kb, (C,), dtype=jnp.float32) if use_bias else None
        got = jax.block_until_ready(
            grn_pallas(x, g, b, force_path=force_path, t_hw=t_hw))
        ref = grn_reference(x, g, b)
        assert got.shape == ref.shape and got.dtype == ref.dtype, name
        ok = jnp.allclose(got.astype(jnp.float32), ref.astype(jnp.float32),
                          atol=atol, rtol=rtol)
        assert ok, f"mismatch vs reference: {name}"

    # 1) Shape implied by the module/test harness -> auto-pipelined single-pass.
    run_case("single_pass_aligned", (2, 4, 16, 16), jnp.float32)
    # 2) Late-stage-like shape (HW=49 < 128 lanes, C not multiple of 8): masked lanes.
    run_case("single_pass_small_hw", (2, 20, 7, 7), jnp.float32)
    # 3) bf16 activations end-to-end (half the HBM bytes), f32 internal math.
    run_case("single_pass_bf16", (2, 8, 16, 16), jnp.bfloat16, atol=3e-2, rtol=3e-2)
    # 4) Manual 1x-slab path (used for v7x-sized feature maps), incl. use_bias=False.
    run_case("manual_slab", (2, 8, 16, 16), jnp.float32, force_path="manual")
    run_case("manual_slab_nobias", (1, 16, 8, 8), jnp.float32, force_path="manual",
             use_bias=False)
    # 5) HW-tiled two-pass path with a ragged last tile (HW=144, t_hw=128 -> K=2).
    run_case("two_pass_ragged", (2, 16, 12, 12), jnp.float32, force_path="two_pass",
             t_hw=128)
    run_case("two_pass_bf16", (1, 16, 12, 12), jnp.bfloat16, force_path="two_pass",
             t_hw=128, atol=3e-2, rtol=3e-2)

    print("KERNEL_OK")
</pallas_src>

<mosaic_0001>
module attributes {stable_mosaic.version = 11 : i64} {
  func.func @_grn_slab_kernel(%arg0: i32, %arg1: memref<1x4x256xf32, #tpu.memory_space<vmem>>, %arg2: memref<4x1xf32, #tpu.memory_space<vmem>>, %arg3: memref<4x1xf32, #tpu.memory_space<vmem>>, %arg4: memref<1x4x256xf32, #tpu.memory_space<vmem>>) attributes {dimension_semantics = [#tpu.dimension_semantics<parallel>], iteration_bounds = array<i64: 2>, scalar_prefetch = 0 : i64, scratch_operands = 0 : i64, tpu.core_type = #tpu.core_type<tc>, window_params = [{transform_indices = @transform_0, window_bounds = array<i64: 1, 4, 256>}, {pipeline_mode = #tpu.pipeline_mode<synchronous>, transform_indices = @transform_1, window_bounds = array<i64: 4, 1>}, {pipeline_mode = #tpu.pipeline_mode<synchronous>, transform_indices = @transform_2, window_bounds = array<i64: 4, 1>}, {transform_indices = @transform_3, window_bounds = array<i64: 1, 4, 256>}]} {
    %cst = arith.constant 0.000000e+00 : f32
    %0 = vector.broadcast %cst : f32 to vector<4x1xf32>
    %c0 = arith.constant 0 : index
    %c0_0 = arith.constant 0 : index
    %c0_1 = arith.constant 0 : index
    %1 = vector.load %arg1[%c0, %c0_0, %c0_1] : memref<1x4x256xf32, #tpu.memory_space<vmem>>, vector<1x4x256xf32>
    %2 = vector.shape_cast %1 : vector<1x4x256xf32> to vector<4x256xf32>
    %3 = arith.mulf %2, %2 : vector<4x256xf32>
    %cst_2 = arith.constant dense<0.000000e+00> : vector<4xf32>
    %4 = vector.multi_reduction <add>, %3, %cst_2 [1] : vector<4x256xf32> to vector<4xf32>
    %5 = vector.shape_cast %4 : vector<4xf32> to vector<4x1xf32>
    %6 = arith.addf %0, %5 : vector<4x1xf32>
    %c0_3 = arith.constant 0 : index
    %c0_4 = arith.constant 0 : index
    %7 = vector.load %arg2[%c0_3, %c0_4] : memref<4x1xf32, #tpu.memory_space<vmem>>, vector<4x1xf32>
    %8 = math.sqrt %6 : vector<4x1xf32>
    %cst_5 = arith.constant dense<0.000000e+00> : vector<1xf32>
    %9 = vector.multi_reduction <add>, %8, %cst_5 [0] : vector<4x1xf32> to vector<1xf32>
    %10 = vector.shape_cast %9 : vector<1xf32> to vector<1x1xf32>
    %cst_6 = arith.constant 4.000000e+00 : f32
    %11 = vector.broadcast %cst_6 : f32 to vector<1x1xf32>
    %12 = arith.divf %10, %11 : vector<1x1xf32>
    %cst_7 = arith.constant 9.99999997E-7 : f32
    %13 = vector.broadcast %cst_7 : f32 to vector<1x1xf32>
    %14 = arith.addf %12, %13 : vector<1x1xf32>
    %15 = vector.broadcast %14 : vector<1x1xf32> to vector<4x1xf32>
    %16 = arith.divf %8, %15 : vector<4x1xf32>
    %17 = arith.mulf %7, %16 : vector<4x1xf32>
    %cst_8 = arith.constant 1.000000e+00 : f32
    %18 = vector.broadcast %cst_8 : f32 to vector<4x1xf32>
    %19 = arith.addf %17, %18 : vector<4x1xf32>
    %c0_9 = arith.constant 0 : index
    %c0_10 = arith.constant 0 : index
    %20 = vector.load %arg3[%c0_9, %c0_10] : memref<4x1xf32, #tpu.memory_space<vmem>>, vector<4x1xf32>
    %c0_11 = arith.constant 0 : index
    %c0_12 = arith.constant 0 : index
    %c0_13 = arith.constant 0 : index
    %21 = vector.load %arg1[%c0_11, %c0_12, %c0_13] : memref<1x4x256xf32, #tpu.memory_space<vmem>>, vector<1x4x256xf32>
    %22 = vector.shape_cast %21 : vector<1x4x256xf32> to vector<4x256xf32>
    %23 = vector.broadcast %19 : vector<4x1xf32> to vector<4x256xf32>
    %24 = arith.mulf %22, %23 : vector<4x256xf32>
    %25 = vector.broadcast %20 : vector<4x1xf32> to vector<4x256xf32>
    %26 = arith.addf %24, %25 : vector<4x256xf32>
    %c0_14 = arith.constant 0 : index
    %c0_15 = arith.constant 0 : index
    %c0_16 = arith.constant 0 : index
    %27 = vector.load %arg4[%c0_14, %c0_15, %c0_16] : memref<1x4x256xf32, #tpu.memory_space<vmem>>, vector<1x4x256xf32>
    %28 = vector.shape_cast %27 : vector<1x4x256xf32> to vector<4x256xf32>
    %29 = vector.shape_cast %26 : vector<4x256xf32> to vector<1x4x256xf32>
    tpu.vector_store %arg4[%c0_14, %c0_15, %c0_16], %29 {strides = array<i32>} : memref<1x4x256xf32, #tpu.memory_space<vmem>>, vector<1x4x256xf32>,
    return
  }
  func.func @transform_0(%arg0: i32) -> (i32, i32, i32) {
    %c0_i32 = arith.constant 0 : i32
    %c0_i32_0 = arith.constant 0 : i32
    %c0_i32_1 = arith.constant 0 : i32
    return %arg0, %c0_i32, %c0_i32_0 : i32, i32, i32
  }
  func.func @transform_1(%arg0: i32) -> (i32, i32) {
    %c0_i32 = arith.constant 0 : i32
    %c0_i32_0 = arith.constant 0 : i32
    %c0_i32_1 = arith.constant 0 : i32
    return %c0_i32, %c0_i32_0 : i32, i32
  }
  func.func @transform_2(%arg0: i32) -> (i32, i32) {
    %c0_i32 = arith.constant 0 : i32
    %c0_i32_0 = arith.constant 0 : i32
    %c0_i32_1 = arith.constant 0 : i32
    return %c0_i32, %c0_i32_0 : i32, i32
  }
  func.func @transform_3(%arg0: i32) -> (i32, i32, i32) {
    %c0_i32 = arith.constant 0 : i32
    %c0_i32_0 = arith.constant 0 : i32
    %c0_i32_1 = arith.constant 0 : i32
    return %arg0, %c0_i32, %c0_i32_0 : i32, i32, i32
  }
}

</mosaic_0001>

<llo_original>
// kernel: tpu_custom_call.1
$region0: #{tpu_custom_call.1}
  #allocation0 [shape = 'u32[]', space=smem, size = 0x4, offset = 0x4, fixed_abs, tag = 'smem constant byte address 0x4 - core index']
  #allocation1 [shape = 'u32[144,128]{1,0:T(1,128)}', space=vmem, size = 0x12000, scoped, tag = 'internal scratch']
  %s0 = inlined_call_operand.hbm [shape: f32[2,4,256], index: 0, kind: input, shape index: {}]
  %s1 = inlined_call_operand.vmem [shape: f32[4,1], index: 1, kind: input, shape index: {}]
  %s2 = inlined_call_operand.vmem [shape: f32[4,1], index: 2, kind: input, shape index: {}]
  %s3 = inlined_call_operand.hbm [shape: f32[2,4,256], index: 3, kind: output, shape index: {}]
  %s4 = sld [smem:[#allocation0]]
  $region49: #{tpu_custom_call.1} parent=0
    _
  %s6 = ssub.s32 1, %s4
  %s7 = scalar_select 0, %s6, %s4
  $region1: #{tpu_custom_call.1} parent=0
    #allocation2 [shape = 'u8[8192]{0}', space=vmem, size = 0x2000, scoped, tag = 'input window, operand 0']
    #allocation3 [shape = 's32[2]{0}', space=sflag, size = 0x8, scoped, tag = 'scoped memory for tpu_custom_call.1']
    #allocation4 [shape = 's32[2]{0}', space=sflag, size = 0x8, scoped, tag = 'scoped memory for tpu_custom_call.1']
    #allocation5 [shape = 'u8[8192]{0}', space=vmem, size = 0x2000, scoped, tag = 'output window, operand 0']
    %8 = vsyncpa [#allocation3], 0
    %s9 = scalar_lea.sflag [#allocation3], 1
    %10 = vsyncpa %s9, 0
    %11 = vsyncpa [#allocation4], 0
    %s12 = scalar_lea.sflag [#allocation4], 1
    %13 = vsyncpa %s12, 0
    loop: start=0, step=1, limit=4
    $region2: #{tpu_custom_call.1} parent=1 // loop_pre_header
      _
    $region3: #{tpu_custom_call.1} parent=1 // loop_header
      %s15 = sphi 0, %s19
      %p16 = scmp.ge.s32.totalorder %s15, 4
      %s25 = sphi 0, %s27
      %s28 = sphi 0, %s25
      %s29 = sphi 0, %s28
      %s45 = sphi 0, %s29
      %s49 = sphi 0, %s49
      %s51 = sphi 0, %s49
      %s52 = sphi 0, %s51
      %s66 = sphi 0, %s52
      %s70 = sphi 0, %s70
      %s72 = sphi 0, %s70
      %s73 = sphi 0, %s72
      %s87 = sphi 0, %s73
      %s93 = sphi 0, %s95
      %s96 = sphi 0, %s93
      %s97 = sphi 0, %s96
      %s113 = sphi 0, %s97
    $region4: #{tpu_custom_call.1} parent=1 // loop_header_branch
      %18 = sbr.rel (%p16) target = $region8
    $region5: #{tpu_custom_call.1} parent=1 // loop_body
      %s20 = ssub.s32 %s15, 1
      %s21 = ssub.s32 %s15, 2
      %s22 = sadd.s32 %s15, 1
      %s23 = ssub.s32 %s15, %s22
      %p24 = scmp.eq.s32.totalorder %s23, 0
      %s26 = sadd.s32 %s25, 1
      %s27 = scalar_select %p24, %s25, %s26
      %p30 = pneg %p24
      %p31 = scmp.eq.s32.totalorder %s15, 1
      %p32 = por %p30, %p31
      %p33 = scmp.ne.s32.totalorder %s25, %s28
      %p34 = scmp.eq.s32.totalorder %s15, 0
      %p35 = por %p33, %p34
      %p36 = scmp.ne.s32.totalorder %s25, %s28
      %p37 = scmp.eq.s32.totalorder %s20, 1
      %p38 = por %p36, %p37
      %p39 = scmp.ne.s32.totalorder %s28, %s29
      %p40 = scmp.eq.s32.totalorder %s20, 0
      %p41 = por %p39, %p40
      %p42 = scmp.ne.s32.totalorder %s28, %s29
      %p43 = scmp.eq.s32.totalorder %s21, 1
      %p44 = por %p42, %p43
      %p46 = scmp.ne.s32.totalorder %s29, %s45
      %p47 = scmp.eq.s32.totalorder %s21, 0
      %p48 = por %p46, %p47
      %s50 = sadd.s32 %s49, 1
      %p53 = scmp.eq.s32.totalorder %s15, 1
      %p54 = scmp.ne.s32.totalorder %s49, %s51
      %p55 = scmp.eq.s32.totalorder %s15, 0
      %p56 = por %p54, %p55
      %p57 = scmp.ne.s32.totalorder %s49, %s51
      %p58 = scmp.eq.s32.totalorder %s20, 1
      %p59 = por %p57, %p58
      %p60 = scmp.ne.s32.totalorder %s51, %s52
      %p61 = scmp.eq.s32.totalorder %s20, 0
      %p62 = por %p60, %p61
      %p63 = scmp.ne.s32.totalorder %s51, %s52
      %p64 = scmp.eq.s32.totalorder %s21, 1
      %p65 = por %p63, %p64
      %p67 = scmp.ne.s32.totalorder %s52, %s66
      %p68 = scmp.eq.s32.totalorder %s21, 0
      %p69 = por %p67, %p68
      %s71 = sadd.s32 %s70, 1
      %p74 = scmp.eq.s32.totalorder %s15, 1
      %p75 = scmp.ne.s32.totalorder %s70, %s72
      %p76 = scmp.eq.s32.totalorder %s15, 0
      %p77 = por %p75, %p76
      %p78 = scmp.ne.s32.totalorder %s70, %s72
      %p79 = scmp.eq.s32.totalorder %s20, 1
      %p80 = por %p78, %p79
      %p81 = scmp.ne.s32.totalorder %s72, %s73
      %p82 = scmp.eq.s32.totalorder %s20, 0
      %p83 = por %p81, %p82
      %p84 = scmp.ne.s32.totalorder %s72, %s73
      %p85 = scmp.eq.s32.totalorder %s21, 1
      %p86 = por %p84, %p85
      %p88 = scmp.ne.s32.totalorder %s73, %s87
      %p89 = scmp.eq.s32.totalorder %s21, 0
      %p90 = por %p88, %p89
      %s91 = ssub.s32 %s15, %s22
      %p92 = scmp.eq.s32.totalorder %s91, 0
      %s94 = sadd.s32 %s93, 1
      %s95 = scalar_select %p92, %s93, %s94
      %p98 = pneg %p92
      %p99 = scmp.eq.s32.totalorder %s15, 1
      %p100 = por %p98, %p99
      %p101 = scmp.ne.s32.totalorder %s93, %s96
      %p102 = scmp.eq.s32.totalorder %s15, 0
      %p103 = por %p101, %p102
      %p104 = scmp.ne.s32.totalorder %s93, %s96
      %p105 = scmp.eq.s32.totalorder %s20, 1
      %p106 = por %p104, %p105
      %p107 = scmp.ne.s32.totalorder %s96, %s97
      %p108 = scmp.eq.s32.totalorder %s20, 0
      %p109 = por %p107, %p108
      %p110 = scmp.ne.s32.totalorder %s96, %s97
      %p111 = scmp.eq.s32.totalorder %s21, 1
      %p112 = por %p110, %p111
      %p114 = scmp.ne.s32.totalorder %s97, %s113
      %p115 = scmp.eq.s32.totalorder %s21, 0
      %p116 = por %p114, %p115
      %p117 = scmp.le.s32.totalorder 1, %s15
      %p118 = scmp.lt.s32.totalorder %s15, 3
      %p119 = pnand %p117, %p118
      %p120 = pneg %p119
      // Predicated region
      $region9: #{tpu_custom_call.1} parent=5 // pred_check
        _
      $region10: #{tpu_custom_call.1} parent=5 // pred_check_branch
        %122 = sbr.rel (%p119) target = $region12
      $region11: #{tpu_custom_call.1} parent=5 // pred_region
        %s123 = ssub.s32 %s15, 1
        // Predicated region
        $region13: #{tpu_custom_call.1} parent=11 // pred_check
          %p124 = pneg %p62
        $region14: #{tpu_custom_call.1} parent=11 // pred_check_branch
          %126 = sbr.rel (%p124) target = $region16
        $region15: #{tpu_custom_call.1} parent=11 // pred_region
          _
        $region16: #{tpu_custom_call.1} parent=11 // pred_fallthru
          _
        // Predicated region
        $region17: #{tpu_custom_call.1} parent=11 // pred_check
          %p127 = pneg %p83
        $region18: #{tpu_custom_call.1} parent=11 // pred_check_branch
          %129 = sbr.rel (%p127) target = $region20
        $region19: #{tpu_custom_call.1} parent=11 // pred_region
          _
        $region20: #{tpu_custom_call.1} parent=11 // pred_fallthru
          _
      $region12: #{tpu_custom_call.1} parent=5 // pred_fallthru
        _
      %p130 = scmp.lt.s32.totalorder %s15, 2
      // Predicated region
      $region21: #{tpu_custom_call.1} parent=5 // pred_check
        %p131 = pneg %p130
      $region22: #{tpu_custom_call.1} parent=5 // pred_check_branch
        %133 = sbr.rel (%p131) target = $region24
      $region23: #{tpu_custom_call.1} parent=5 // pred_region
        // Predicated region
        $region25: #{tpu_custom_call.1} parent=23 // pred_check
          %p134 = pneg %p35
        $region26: #{tpu_custom_call.1} parent=23 // pred_check_branch
          %136 = sbr.rel (%p134) target = $region28
        $region27: #{tpu_custom_call.1} parent=23 // pred_region
          %s137 = sand.u32 %s25, 1
          %s138 = scalar_lea.sflag [#allocation3], %s137
          %s139 = sand.u32 %s25, 1
          %s140 = smul.addr %s139, 8
          %s141 = scalar_lea.vmem [#allocation2], %s140
          %s143 = ssub.s32 128, 128
          %144 = vsyncadd %s138, %s143
          %s145 = smul.addr %s15, 2
          %s146 = smul.addr %s145, 64
          %s147 = scalar_lea.hbm %s0, %s146
          %s149 = sshll.u32 %s141, 4
          %s150 = int_to_ptr.vmem [resolvable:$true] %s149
          %152 = dma.hbm_to_vmem [thread:$0]  %s147, 128, %s150, %s138
        $region28: #{tpu_custom_call.1} parent=23 // pred_fallthru
          _
      $region24: #{tpu_custom_call.1} parent=5 // pred_fallthru
        _
      %p153 = scmp.le.s32.totalorder 1, %s15
      %p154 = scmp.lt.s32.totalorder %s15, 3
      %p155 = pnand %p153, %p154
      %p156 = pneg %p155
      // Predicated region
      $region29: #{tpu_custom_call.1} parent=5 // pred_check
        _
      $region30: #{tpu_custom_call.1} parent=5 // pred_check_branch
        %158 = sbr.rel (%p155) target = $region32
      $region31: #{tpu_custom_call.1} parent=5 // pred_region
        %s159 = ssub.s32 %s15, 1
        %s160 = sand.u32 %s28, 1
        %s161 = scalar_lea.sflag [#allocation3], %s160
        %s162 = sand.u32 %s28, 1
        %s163 = smul.addr %s162, 8
        %s164 = scalar_lea.vmem [#allocation2], %s163
        // Predicated region
        $region33: #{tpu_custom_call.1} parent=31 // pred_check
          %p165 = pneg %p41
        $region34: #{tpu_custom_call.1} parent=31 // pred_check_branch
          %167 = sbr.rel (%p165) target = $region36
        $region35: #{tpu_custom_call.1} parent=31 // pred_region
          %168 = dma.done %s161, 128
        $region36: #{tpu_custom_call.1} parent=31 // pred_fallthru
          _
        %s169 = sand.u32 %s28, 1
        %s170 = scalar_lea.sflag [#allocation3], %s169
        %s171 = sand.u32 %s28, 1
        %s172 = smul.addr %s171, 8
        %s173 = scalar_lea.vmem [#allocation2], %s172
        %p174 = pneg %p41
        %p175 = pneg %p38
        %p176 = pneg %p62
        %p177 = pneg %p59
        %p178 = pneg %p83
        %p179 = pneg %p80
        %p180 = pneg %p109
        %p181 = pneg %p106
        %s182 = sand.u32 %s96, 1
        %s183 = scalar_lea.sflag [#allocation4], %s182
        %s184 = sand.u32 %s96, 1
        %s185 = smul.addr %s184, 8
        %s186 = scalar_lea.vmem [#allocation5], %s185
        %v187 = vld [vmem:[%s164] sm:$0xff]
        %v188 = vmul.f32 %v187, %v187
        %v190 = vcombine.high %v188, %v188
        %vm192 = vcmask 1043456
        %v193 = vsel %vm192, %v188, 0.0
        %v194 = vsel %vm192, %v190, 0.0
        %v195 = vadd.f32 %v193, %v194
        %196 = vadd.xlane.f32.xlu0 %v195
        %v197 = vpop.xlane.xlu0 %196
        %v198 = vadd.f32 %v197, 0.0
        %v199 = vld [vmem:[%s1] sm:$0xf]
        %v200 = vrsqrt.pop %v198
        %v201 = vmul.f32 %v198, %v200
        %vm202 = vcmp.eq.f32.partialorder %v198, inf
        %v203 = vsel %vm202, %v198, %v201
        %vm204 = vcmp.eq.f32.partialorder %v198, 0.0
        %v205 = vand.u32 %v198, 2147483648
        %v206 = vsel %vm204, %v205, %v203
        %v207 = vsel %vm192, %v206, 0.0
        %v208 = vrot.slane %v207, 4
        %v209 = vadd.f32 %v207, %v208
        %v210 = vrot.slane %v209, 2
        %v211 = vadd.f32 %v209, %v210
        %v212 = vrot.slane %v211, 1
        %v213 = vadd.f32 %v211, %v212
        %v214 = vrcp.pop 4.0
        %v215 = vmul.f32 %v213, %v214
        %v216 = vadd.f32 %v215, 1e-06
        %v217 = vrcp.pop %v216
        %v218 = vmul.f32 %v206, %v217
        %v219 = vmul.f32 %v199, %v218
        %v220 = vadd.f32 %v219, 1.0
        %v221 = vld [vmem:[%s2] sm:$0xf]
        %223 = vset.pattern.permute.xlu0 0
        %224 = vperm.xlu0 %223, %v220
        %v225 = vpop.permute.xlu0 %224
        %v227 = vunpack.c.l.s4 839922192
        %v228 = vunpack.c.0.s8 %v227
        %v229 = vlaneseq
        %v230 = vshrl.u32 %v229, 7
        %v231 = vsub.s32 %v228, %v230
        %v232 = vrot.slane %v225, %v231
        %v234 = vmul.f32 %v187, %v232
        %236 = vset.pattern.permute.xlu0 0
        %237 = vperm.xlu0 %236, %v221
        %v238 = vpop.permute.xlu0 %237
        %v240 = vunpack.c.l.s4 839922192
        %v241 = vunpack.c.0.s8 %v240
        %v242 = vlaneseq
        %v243 = vshrl.u32 %v242, 7
        %v244 = vsub.s32 %v241, %v243
        %v245 = vrot.slane %v238, %v244
        %v247 = vadd.f32 %v234, %v245
        %248 = vst [vmem:[%s186] sm:$0xff] %v247
        %s249 = sand.u32 %s96, 1
        %s250 = scalar_lea.sflag [#allocation4], %s249
        %s251 = sand.u32 %s96, 1
        %s252 = smul.addr %s251, 8
        %s253 = scalar_lea.vmem [#allocation5], %s252
        // Predicated region
        $region37: #{tpu_custom_call.1} parent=31 // pred_check
          %p254 = pneg %p106
        $region38: #{tpu_custom_call.1} parent=31 // pred_check_branch
          %256 = sbr.rel (%p254) target = $region40
        $region39: #{tpu_custom_call.1} parent=31 // pred_region
          %s258 = ssub.s32 128, 128
          %259 = vsyncadd %s250, %s258
          %s260 = smul.addr %s20, 2
          %s261 = smul.addr %s260, 64
          %s262 = scalar_lea.hbm %s3, %s261
          %s264 = sshll.u32 %s253, 4
          %s265 = int_to_ptr.vmem [resolvable:$true] %s264
          %267 = dma.vmem_to_hbm [thread:$0]  %s265, 128, %s262, %s250
        $region40: #{tpu_custom_call.1} parent=31 // pred_fallthru
          _
      $region32: #{tpu_custom_call.1} parent=5 // pred_fallthru
        _
      %p268 = scmp.le.s32.totalorder 2, %s15
      // Predicated region
      $region41: #{tpu_custom_call.1} parent=5 // pred_check
        %p269 = pneg %p268
      $region42: #{tpu_custom_call.1} parent=5 // pred_check_branch
        %271 = sbr.rel (%p269) target = $region44
      $region43: #{tpu_custom_call.1} parent=5 // pred_region
        %s272 = ssub.s32 %s15, 2
        // Predicated region
        $region45: #{tpu_custom_call.1} parent=43 // pred_check
          %p273 = pneg %p112
        $region46: #{tpu_custom_call.1} parent=43 // pred_check_branch
          %275 = sbr.rel (%p273) target = $region48
        $region47: #{tpu_custom_call.1} parent=43 // pred_region
          %s276 = sand.u32 %s97, 1
          %s277 = scalar_lea.sflag [#allocation4], %s276
          %s278 = sand.u32 %s97, 1
          %s279 = smul.addr %s278, 8
          %s280 = scalar_lea.vmem [#allocation5], %s279
          %281 = dma.done %s277, 128
        $region48: #{tpu_custom_call.1} parent=43 // pred_fallthru
          _
      $region44: #{tpu_custom_call.1} parent=5 // pred_fallthru
        _
    $region6: #{tpu_custom_call.1} parent=1 // loop_footer
      %s19 = sadd.s32 1, %s15
    $region7: #{tpu_custom_call.1} parent=1 // loop_footer_branch
      %14 = sbr.rel target = $region3
    $region8: #{tpu_custom_call.1} parent=1 // loop_exit
      _
    %282 = vsyncpa [#allocation3], 1
    %s283 = scalar_lea.sflag [#allocation3], 1
    %284 = vsyncpa %s283, 1
    %285 = vsyncpa [#allocation4], 1
    %s286 = scalar_lea.sflag [#allocation4], 1
    %287 = vsyncpa %s286, 1

</llo_original>
